<compile_context>
chip_gen: v5e
topology: v5e:2x2
jax: 0.10.0
libtpu: 0.0.40
codegen_flags: <defaults>
</compile_context>

<pallas_src>
import jax
import jax.numpy as jnp
from jax.experimental import pallas as pl
from jax.experimental.pallas import tpu as pltpu

IN_DIM = 4
HID_DIM = 32
OUT_DIM = 3
HID_PAD = 128   # hidden dim padded to one full lane width (VMEM-internal only)
OUT_PAD = 8     # output dim padded to 8 lanes (lane-narrow but DMA-cheap)
MAX_TB = 1024   # max batch rows per tile


def _round_up(n, m):
    return ((n + m - 1) // m) * m


def _pick_batch_tiling(B):
    """Pick (TB, padded_B) so the grid has >=2 balanced tiles when possible
    (v7x two-TC sharding) and tiles stay large enough to amortize per-step
    overhead for big batches."""
    Bp = _round_up(max(B, 8), 8)
    if Bp < 16:
        return Bp, Bp                      # single tiny tile
    if Bp <= MAX_TB:
        tiles = 2                          # two balanced tiles
    else:
        tiles = pl.cdiv(Bp, MAX_TB)
        if tiles % 2:
            tiles += 1                     # keep tile count even for v7x
    TB = _round_up(pl.cdiv(Bp, tiles), 8)
    return TB, TB * tiles


def mlp_kernel(x_ref, w1_ref, b1_ref, w2_ref, b2_ref, o_ref):
    # x: (TB, 4) f32, w1: (4, 128), b1: (1, 128), w2: (128, 8), b2: (1, 8)
    # o: (TB, 8)  -- lanes 3..7 are exact zeros (weight/bias padding is 0).
    x = x_ref[...]

    # fc1 + ReLU  (MXU matmul, VPU elementwise). Padded hidden lanes come out
    # as relu(0 + 0) = 0 and contribute nothing downstream.
    h = jnp.dot(x, w1_ref[...], preferred_element_type=jnp.float32)
    h = jnp.maximum(h + b1_ref[...], 0.0)

    # out layer. Padded output lanes are h @ 0 + 0 = 0.
    y = jnp.dot(h, w2_ref[...], preferred_element_type=jnp.float32)
    o_ref[...] = (y + b2_ref[...]).astype(o_ref.dtype)


def mlp_forward(x, w1p, b1p, w2p, b2p):
    """x: (B, 4) f32.  w*/b* are the lane-padded params from pad_params()."""
    B, K = x.shape
    TB, Bp = _pick_batch_tiling(B)
    if Bp != B:
        x = jnp.pad(x, ((0, Bp - B), (0, 0)))
    grid = (Bp // TB,)

    y_padded = pl.pallas_call(
        mlp_kernel,
        out_shape=jax.ShapeDtypeStruct((Bp, OUT_PAD), x.dtype),
        grid=grid,
        in_specs=[
            # batch-tiled activation stream (double-buffered by Pallas)
            pl.BlockSpec((TB, K), lambda i: (i, 0)),
            # weights/biases: full-array blocks, resident across all tiles
            pl.BlockSpec(w1p.shape, lambda i: (0, 0)),
            pl.BlockSpec(b1p.shape, lambda i: (0, 0)),
            pl.BlockSpec(w2p.shape, lambda i: (0, 0)),
            pl.BlockSpec(b2p.shape, lambda i: (0, 0)),
        ],
        out_specs=pl.BlockSpec((TB, OUT_PAD), lambda i: (i, 0)),
        compiler_params=pltpu.CompilerParams(
            dimension_semantics=("parallel",),  # shard batch tiles on v7x's 2 TCs
        ),
    )(x, w1p, b1p, w2p, b2p)

    # Strip batch padding and the zero lanes 3..7 (cheap: only 8 lanes wide).
    return y_padded[:B, :OUT_DIM]


def init_params(key):
    """Unpadded params, nn.Linear-style init, stored as (in, out)."""
    k1, k2, k3, k4 = jax.random.split(key, 4)
    bound1 = 1.0 / jnp.sqrt(IN_DIM)
    bound2 = 1.0 / jnp.sqrt(HID_DIM)
    w1 = jax.random.uniform(k1, (IN_DIM, HID_DIM), jnp.float32, -bound1, bound1)
    b1 = jax.random.uniform(k2, (1, HID_DIM), jnp.float32, -bound1, bound1)
    w2 = jax.random.uniform(k3, (HID_DIM, OUT_DIM), jnp.float32, -bound2, bound2)
    b2 = jax.random.uniform(k4, (1, OUT_DIM), jnp.float32, -bound2, bound2)
    return w1, b1, w2, b2


def pad_params(w1, b1, w2, b2):
    """One-time zero-padding to aligned shapes (numerically exact)."""
    w1p = jnp.zeros((IN_DIM, HID_PAD), jnp.float32).at[:, :HID_DIM].set(w1)
    b1p = jnp.zeros((1, HID_PAD), jnp.float32).at[:, :HID_DIM].set(b1)
    w2p = jnp.zeros((HID_PAD, OUT_PAD), jnp.float32).at[:HID_DIM, :OUT_DIM].set(w2)
    b2p = jnp.zeros((1, OUT_PAD), jnp.float32).at[:, :OUT_DIM].set(b2)
    return w1p, b1p, w2p, b2p


def _reference(x, w1, b1, w2, b2):
    return jnp.maximum(x @ w1 + b1, 0.0) @ w2 + b2


if __name__ == "__main__":
    key = jax.random.PRNGKey(0)
    kx, kx2, kp = jax.random.split(key, 3)

    w1, b1, w2, b2 = init_params(kp)
    w1p, b1p, w2p, b2p = pad_params(w1, b1, w2, b2)

    # Small batch: single-tile path.
    batch = 8
    x = jax.random.normal(kx, (batch, IN_DIM), jnp.float32)
    y = mlp_forward(x, w1p, b1p, w2p, b2p)
    jax.block_until_ready(y)
    ref = _reference(x, w1, b1, w2, b2)
    assert y.shape == (batch, OUT_DIM)
    assert jnp.allclose(y, ref, atol=1e-5, rtol=1e-5)

    # Slightly larger batch: exercises the 2-tile grid + batch-padding path.
    batch2 = 48
    x2 = jax.random.normal(kx2, (batch2, IN_DIM), jnp.float32)
    y2 = mlp_forward(x2, w1p, b1p, w2p, b2p)
    jax.block_until_ready(y2)
    ref2 = _reference(x2, w1, b1, w2, b2)
    assert y2.shape == (batch2, OUT_DIM)
    assert jnp.allclose(y2, ref2, atol=1e-5, rtol=1e-5)

    print("KERNEL_OK")
</pallas_src>

<mosaic_0001>
module attributes {stable_mosaic.version = 11 : i64} {
  func.func @mlp_kernel(%arg0: i32, %arg1: memref<8x4xf32, #tpu.memory_space<vmem>>, %arg2: memref<4x128xf32, #tpu.memory_space<vmem>>, %arg3: memref<1x128xf32, #tpu.memory_space<vmem>>, %arg4: memref<128x8xf32, #tpu.memory_space<vmem>>, %arg5: memref<1x8xf32, #tpu.memory_space<vmem>>, %arg6: memref<8x8xf32, #tpu.memory_space<vmem>>) attributes {dimension_semantics = [#tpu.dimension_semantics<parallel>], iteration_bounds = array<i64: 1>, scalar_prefetch = 0 : i64, scratch_operands = 0 : i64, tpu.core_type = #tpu.core_type<tc>, window_params = [{transform_indices = @transform_0, window_bounds = array<i64: 8, 4>}, {pipeline_mode = #tpu.pipeline_mode<synchronous>, transform_indices = @transform_1, window_bounds = array<i64: 4, 128>}, {pipeline_mode = #tpu.pipeline_mode<synchronous>, transform_indices = @transform_2, window_bounds = array<i64: 1, 128>}, {pipeline_mode = #tpu.pipeline_mode<synchronous>, transform_indices = @transform_3, window_bounds = array<i64: 128, 8>}, {pipeline_mode = #tpu.pipeline_mode<synchronous>, transform_indices = @transform_4, window_bounds = array<i64: 1, 8>}, {transform_indices = @transform_5, window_bounds = array<i64: 8, 8>}]} {
    %c0 = arith.constant 0 : index
    %c0_0 = arith.constant 0 : index
    %0 = vector.load %arg1[%c0, %c0_0] : memref<8x4xf32, #tpu.memory_space<vmem>>, vector<8x4xf32>
    %c0_1 = arith.constant 0 : index
    %c0_2 = arith.constant 0 : index
    %1 = vector.load %arg2[%c0_1, %c0_2] : memref<4x128xf32, #tpu.memory_space<vmem>>, vector<4x128xf32>
    %cst = arith.constant dense<0.000000e+00> : vector<8x128xf32>
    %2 = tpu.matmul %0, %1, %cst {dimension_numbers = #tpu.dot_dimension_numbers<[1], [0], [0], [1], [0, 0, 1, 1], [], []>} : vector<8x4xf32>, vector<4x128xf32>, vector<8x128xf32> -> vector<8x128xf32>
    %c0_3 = arith.constant 0 : index
    %c0_4 = arith.constant 0 : index
    %3 = vector.load %arg3[%c0_3, %c0_4] : memref<1x128xf32, #tpu.memory_space<vmem>>, vector<1x128xf32>
    %4 = vector.broadcast %3 : vector<1x128xf32> to vector<8x128xf32>
    %5 = arith.addf %2, %4 : vector<8x128xf32>
    %cst_5 = arith.constant 0.000000e+00 : f32
    %6 = vector.broadcast %cst_5 : f32 to vector<8x128xf32>
    %7 = arith.maximumf %5, %6 : vector<8x128xf32>
    %c0_6 = arith.constant 0 : index
    %c0_7 = arith.constant 0 : index
    %8 = vector.load %arg4[%c0_6, %c0_7] : memref<128x8xf32, #tpu.memory_space<vmem>>, vector<128x8xf32>
    %cst_8 = arith.constant dense<0.000000e+00> : vector<8x8xf32>
    %9 = tpu.matmul %7, %8, %cst_8 {dimension_numbers = #tpu.dot_dimension_numbers<[1], [0], [0], [1], [0, 0, 1, 1], [], []>} : vector<8x128xf32>, vector<128x8xf32>, vector<8x8xf32> -> vector<8x8xf32>
    %c0_9 = arith.constant 0 : index
    %c0_10 = arith.constant 0 : index
    %10 = vector.load %arg5[%c0_9, %c0_10] : memref<1x8xf32, #tpu.memory_space<vmem>>, vector<1x8xf32>
    %11 = vector.broadcast %10 : vector<1x8xf32> to vector<8x8xf32>
    %12 = arith.addf %9, %11 : vector<8x8xf32>
    %c0_11 = arith.constant 0 : index
    %c0_12 = arith.constant 0 : index
    %13 = vector.load %arg6[%c0_11, %c0_12] : memref<8x8xf32, #tpu.memory_space<vmem>>, vector<8x8xf32>
    tpu.vector_store %arg6[%c0_11, %c0_12], %12 {strides = array<i32>} : memref<8x8xf32, #tpu.memory_space<vmem>>, vector<8x8xf32>,
    return
  }
  func.func @transform_0(%arg0: i32) -> (i32, i32) {
    %c0_i32 = arith.constant 0 : i32
    %c0_i32_0 = arith.constant 0 : i32
    return %arg0, %c0_i32 : i32, i32
  }
  func.func @transform_1(%arg0: i32) -> (i32, i32) {
    %c0_i32 = arith.constant 0 : i32
    %c0_i32_0 = arith.constant 0 : i32
    %c0_i32_1 = arith.constant 0 : i32
    return %c0_i32, %c0_i32_0 : i32, i32
  }
  func.func @transform_2(%arg0: i32) -> (i32, i32) {
    %c0_i32 = arith.constant 0 : i32
    %c0_i32_0 = arith.constant 0 : i32
    %c0_i32_1 = arith.constant 0 : i32
    return %c0_i32, %c0_i32_0 : i32, i32
  }
  func.func @transform_3(%arg0: i32) -> (i32, i32) {
    %c0_i32 = arith.constant 0 : i32
    %c0_i32_0 = arith.constant 0 : i32
    %c0_i32_1 = arith.constant 0 : i32
    return %c0_i32, %c0_i32_0 : i32, i32
  }
  func.func @transform_4(%arg0: i32) -> (i32, i32) {
    %c0_i32 = arith.constant 0 : i32
    %c0_i32_0 = arith.constant 0 : i32
    %c0_i32_1 = arith.constant 0 : i32
    return %c0_i32, %c0_i32_0 : i32, i32
  }
  func.func @transform_5(%arg0: i32) -> (i32, i32) {
    %c0_i32 = arith.constant 0 : i32
    %c0_i32_0 = arith.constant 0 : i32
    return %arg0, %c0_i32 : i32, i32
  }
}

</mosaic_0001>

<llo_original>
// kernel: tpu_custom_call.1
$region0: #{tpu_custom_call.1}
  #allocation0 [shape = 'u32[]', space=smem, size = 0x4, offset = 0x4, fixed_abs, tag = 'smem constant byte address 0x4 - core index']
  #allocation1 [shape = 'u32[72,128]{1,0:T(1,128)}', space=vmem, size = 0x9000, scoped, tag = 'internal scratch']
  %s0 = inlined_call_operand.vmem [shape: f32[8,4], index: 0, kind: input, shape index: {}]
  %s1 = inlined_call_operand.vmem [shape: f32[4,128], index: 1, kind: input, shape index: {}]
  %s2 = inlined_call_operand.vmem [shape: f32[1,128], index: 2, kind: input, shape index: {}]
  %s3 = inlined_call_operand.vmem [shape: f32[128,8], index: 3, kind: input, shape index: {}]
  %s4 = inlined_call_operand.vmem [shape: f32[1,8], index: 4, kind: input, shape index: {}]
  %s5 = inlined_call_operand.hbm [shape: f32[8,8], index: 5, kind: output, shape index: {}]
  %s6 = sld [smem:[#allocation0]]
  $region30: #{tpu_custom_call.1} parent=0
    _
  %s8 = ssub.s32 1, %s6
  %s9 = scalar_select 0, %s8, %s6
  $region1: #{tpu_custom_call.1} parent=0
    #allocation2 [shape = 'u8[4096]{0}', space=vmem, size = 0x1000, scoped, tag = 'output window, operand 0, single buffered']
    #allocation3 [shape = 's32[1]{0}', space=sflag, size = 0x4, scoped, tag = 'scoped memory for tpu_custom_call.1']
    %10 = vsyncpa [#allocation3], 0
    // Predicated region
    $region2: #{tpu_custom_call.1} parent=1 // pred_check
      _
    $region3: #{tpu_custom_call.1} parent=1 // pred_check_branch
      %12 = sbr.rel (0) target = $region5
    $region4: #{tpu_custom_call.1} parent=1 // pred_region
      _
    $region5: #{tpu_custom_call.1} parent=1 // pred_fallthru
      _
    // Predicated region
    $region6: #{tpu_custom_call.1} parent=1 // pred_check
      _
    $region7: #{tpu_custom_call.1} parent=1 // pred_check_branch
      %14 = sbr.rel (0) target = $region9
    $region8: #{tpu_custom_call.1} parent=1 // pred_region
      _
    $region9: #{tpu_custom_call.1} parent=1 // pred_fallthru
      _
    // Predicated region
    $region10: #{tpu_custom_call.1} parent=1 // pred_check
      _
    $region11: #{tpu_custom_call.1} parent=1 // pred_check_branch
      %16 = sbr.rel (0) target = $region13
    $region12: #{tpu_custom_call.1} parent=1 // pred_region
      _
    $region13: #{tpu_custom_call.1} parent=1 // pred_fallthru
      _
    // Predicated region
    $region14: #{tpu_custom_call.1} parent=1 // pred_check
      _
    $region15: #{tpu_custom_call.1} parent=1 // pred_check_branch
      %18 = sbr.rel (0) target = $region17
    $region16: #{tpu_custom_call.1} parent=1 // pred_region
      _
    $region17: #{tpu_custom_call.1} parent=1 // pred_fallthru
      _
    // Predicated region
    $region18: #{tpu_custom_call.1} parent=1 // pred_check
      _
    $region19: #{tpu_custom_call.1} parent=1 // pred_check_branch
      %20 = sbr.rel (0) target = $region21
    $region20: #{tpu_custom_call.1} parent=1 // pred_region
      _
    $region21: #{tpu_custom_call.1} parent=1 // pred_fallthru
      _
    %v21 = vld [vmem:[%s0] sm:$0xff]
    %v22 = vld [vmem:[%s1] sm:$0xf]
    %v23 = vld [vmem:[%s2] sm:$0x1]
    %v25 = vperm.slane %v23, 0
    %vm27 = vcmask 31744
    %v29 = vsel %vm27, %v21, 0
    %vm31 = vcmask 1043456
    %v33 = vsel %vm31, %v22, 0
    %35 = vmatpush.msra.mxu0 0.0
    %36 = vmatpush.msra.mxu0 0.0
    %37 = vmatpush.msra.mxu0 0.0
    %38 = vmatpush.msra.mxu0 0.0
    %39 = vmatpush.msra.mxu0 0.0
    %40 = vmatpush.msra.mxu0 0.0
    %41 = vmatpush.msra.mxu0 0.0
    %42 = vmatpush.msra.mxu0 0.0
    %43 = vmatpush.msra.mxu0 0.0
    %44 = vmatpush.msra.mxu0 0.0
    %45 = vmatpush.msra.mxu0 0.0
    %46 = vmatpush.msra.mxu0 0.0
    %47 = vmatpush.msra.mxu0 0.0
    %48 = vmatpush.msra.mxu0 0.0
    %49 = vmatpush.msra.mxu0 0.0
    %50 = vmatpush.msra.mxu0 %v33
    %51 = vmatmul.f32.gmra.mxu0 %v29
    %v52 = vpop.f32.mrf.mxu0
    %v53 = vadd.f32 %v25, %v52
    %54 = vdwg.mxu0
    %v55 = vmax.f32 %v53, 0.0
    %v56 = vld [vmem:[%s3] sm:$0xff]
    %v57 = vld [vmem:[%s3 + $0x8] sm:$0xff]
    %v58 = vld [vmem:[%s3 + $0x10] sm:$0xff]
    %v59 = vld [vmem:[%s3 + $0x18] sm:$0xff]
    %v60 = vld [vmem:[%s3 + $0x20] sm:$0xff]
    %v61 = vld [vmem:[%s3 + $0x28] sm:$0xff]
    %v62 = vld [vmem:[%s3 + $0x30] sm:$0xff]
    %v63 = vld [vmem:[%s3 + $0x38] sm:$0xff]
    %v64 = vld [vmem:[%s3 + $0x40] sm:$0xff]
    %v65 = vld [vmem:[%s3 + $0x48] sm:$0xff]
    %v66 = vld [vmem:[%s3 + $0x50] sm:$0xff]
    %v67 = vld [vmem:[%s3 + $0x58] sm:$0xff]
    %v68 = vld [vmem:[%s3 + $0x60] sm:$0xff]
    %v69 = vld [vmem:[%s3 + $0x68] sm:$0xff]
    %v70 = vld [vmem:[%s3 + $0x70] sm:$0xff]
    %v71 = vld [vmem:[%s3 + $0x78] sm:$0xff]
    %v72 = vld [vmem:[%s4] sm:$0x1]
    %v74 = vperm.slane %v72, 0
    %76 = vmatpush.msra.mxu0 %v71
    %77 = vmatpush.msra.mxu0 %v70
    %78 = vmatpush.msra.mxu0 %v69
    %79 = vmatpush.msra.mxu0 %v68
    %80 = vmatpush.msra.mxu0 %v67
    %81 = vmatpush.msra.mxu0 %v66
    %82 = vmatpush.msra.mxu0 %v65
    %83 = vmatpush.msra.mxu0 %v64
    %84 = vmatpush.msra.mxu0 %v63
    %85 = vmatpush.msra.mxu0 %v62
    %86 = vmatpush.msra.mxu0 %v61
    %87 = vmatpush.msra.mxu0 %v60
    %88 = vmatpush.msra.mxu0 %v59
    %89 = vmatpush.msra.mxu0 %v58
    %90 = vmatpush.msra.mxu0 %v57
    %91 = vmatpush.msra.mxu0 %v56
    %92 = vmatmul.f32.gmra.mxu0 %v55
    %v93 = vpop.f32.mrf.mxu0
    %v94 = vadd.f32 %v74, %v93
    %95 = vdwg.mxu0
    %vm96 = vcmask 64512
    %97 = vst.msk [vmem:[#allocation2] sm:$0xff] %vm96, %v94
    // Predicated region
    $region22: #{tpu_custom_call.1} parent=1 // pred_check
      _
    $region23: #{tpu_custom_call.1} parent=1 // pred_check_branch
      %99 = sbr.rel (0) target = $region25
    $region24: #{tpu_custom_call.1} parent=1 // pred_region
      %101 = vsyncadd [#allocation3], 0
      %s103 = sshll.u32 [#allocation2], 4
      %s104 = int_to_ptr.vmem [resolvable:$true] %s103
      %s105 = sshll.u32 %s5, 4
      %s106 = int_to_ptr.hbm [resolvable:$true] %s105
      %108 = dma.vmem_to_hbm [thread:$0]  %s104, 128, %s106, [#allocation3]
    $region25: #{tpu_custom_call.1} parent=1 // pred_fallthru
      _
    // Predicated region
    $region26: #{tpu_custom_call.1} parent=1 // pred_check
      _
    $region27: #{tpu_custom_call.1} parent=1 // pred_check_branch
      %110 = sbr.rel (0) target = $region29
    $region28: #{tpu_custom_call.1} parent=1 // pred_region
      %112 = dma.done [#allocation3], 128
    $region29: #{tpu_custom_call.1} parent=1 // pred_fallthru
      _
    %113 = vsyncpa [#allocation3], 1

</llo_original>
